<compile_context>
chip_gen: v7x
topology: tpu7x:2x2x1
jax: 0.10.0
libtpu: 0.0.40
codegen_flags: <defaults>
</compile_context>

<pallas_src>
import jax
import jax.numpy as jnp
from jax.experimental import pallas as pl
from jax.experimental.pallas import tpu as pltpu

BN_EPS = 1e-5   # torch BatchNorm1d default


# ----------------------------- fused Bottle2neck kernel ------------------------------
def _make_kernel(cfg, T, spt, identity_residual):
    k = cfg["kernel_size"]
    dil = cfg["dilation"]
    scale = cfg["scale"]
    planes = cfg["planes"]
    width = planes // scale
    nums = scale - 1
    c_mid = width * scale
    L = spt * T
    bf16 = jnp.bfloat16

    def kernel(x_ref, w1_ref, wm_ref, w3_ref, afw_ref, c_ref, o_ref):
        xv = x_ref[...]                                   # (C_in, L) f32, time/batch in lanes
        C = c_ref[...]                                    # (rows, 11) packed per-channel constants

        b1 = C[:c_mid, 0:1]
        bn1s, bn1h = C[:c_mid, 1:2], C[:c_mid, 2:3]
        b3 = C[:planes, 6:7]
        bn3s, bn3h = C[:planes, 7:8], C[:planes, 8:9]
        afb = C[:planes, 9:10]
        alpha = C[:planes, 10:11]

        # ---- fused conv1 (1x1) + residual 1x1 conv: single stacked matmul ---------
        y = jnp.dot(w1_ref[...], xv.astype(bf16), preferred_element_type=jnp.float32)
        h = y[:c_mid, :] + b1
        residual = xv if identity_residual else y[c_mid:, :]

        # ReLU -> BN1 (eval-mode affine)
        h = jnp.maximum(h, 0.0)
        h = h * bn1s + bn1h                               # (c_mid, L)

        # ---- Res2Net hierarchical dilated convs ------------------------------------
        # Hoisted per-tap boundary masks.  Local time within each sample's T-lane
        # segment -> global roll + per-sample mask == per-sample zero padding.
        t_loc = jax.lax.broadcasted_iota(jnp.int32, (width, L), 1) % T
        tap_mask = {}
        for j in range(k):
            off = (j - k // 2) * dil
            if off > 0:
                tap_mask[off] = t_loc < (T - off)
            elif off < 0:
                tap_mask[off] = t_loc >= (-off)

        def shift_time(v, off):
            # v[:, t + off] with zero fill outside [0, T) per sample.
            if off == 0:
                return v
            rolled = pltpu.roll(v, shift=(-off) % L, axis=1)
            return jnp.where(tap_mask[off], rolled, 0.0)

        chunks = []
        sp = None
        for i in range(nums):
            spx_i = h[i * width:(i + 1) * width, :]       # split chunk i
            sp = spx_i if i == 0 else sp + spx_i
            # im2col along sublanes: (k*width, L) slab, then ONE matmul per conv.
            slab = jnp.concatenate(
                [shift_time(sp, (j - k // 2) * dil) for j in range(k)], axis=0)
            sp = jnp.dot(wm_ref[i], slab.astype(bf16),
                         preferred_element_type=jnp.float32)
            sp = sp + C[i * width:(i + 1) * width, 3:4]   # conv bias
            sp = jnp.maximum(sp, 0.0)                     # ReLU
            sp = (sp * C[i * width:(i + 1) * width, 4:5]
                  + C[i * width:(i + 1) * width, 5:6])    # bns[i] (eval affine)
            chunks.append(sp)
        chunks.append(h[nums * width:, :])                # last split chunk, untouched
        cat = jnp.concatenate(chunks, axis=0)             # (c_mid, L)

        # ---- conv3 (1x1) -> ReLU -> BN3 -> + residual -------------------------------
        out = jnp.dot(w3_ref[...], cat.astype(bf16),
                      preferred_element_type=jnp.float32) + b3
        out = jnp.maximum(out, 0.0)
        out = out * bn3s + bn3h
        out = out + residual                              # (planes, L)

        # ---- AFMS: mean over time FIRST (lane reduction), then tiny fc -------------
        inv_T = 1.0 / T
        if spt == 1:
            mean = jnp.sum(out, axis=1, keepdims=True) * inv_T          # (planes, 1)
            y_af = jax.nn.sigmoid(
                jnp.dot(afw_ref[...], mean.astype(bf16),
                        preferred_element_type=jnp.float32) + afb)
            o_ref[...] = (out + alpha) * y_af
        else:
            seg = jax.lax.broadcasted_iota(jnp.int32, (planes, L), 1) // T
            means = [jnp.sum(jnp.where(seg == s, out, 0.0), axis=1, keepdims=True) * inv_T
                     for s in range(spt)]
            mean_mat = jnp.concatenate(means, axis=1)                   # (planes, spt)
            ys = jax.nn.sigmoid(
                jnp.dot(afw_ref[...], mean_mat.astype(bf16),
                        preferred_element_type=jnp.float32) + afb)      # (planes, spt)
            ybc = ys[:, 0:1]
            for s in range(1, spt):
                ybc = jnp.where(seg == s, ys[:, s:s + 1], ybc)
            o_ref[...] = (out + alpha) * ybc

    return kernel


# ----------------------------- host-side wrapper -------------------------------------
def _bn_affine(bn):
    s = bn["gamma"] / jnp.sqrt(bn["var"] + BN_EPS)
    return s, bn["beta"] - bn["mean"] * s


def _pick_samples_per_tile(B, T):
    """Samples per lane tile: target <=512 lanes, keep >=2 grid steps when B>=2."""
    if T % 128 != 0:
        return B                       # single full-width block (equal to full dims)
    max_spt = max(1, 512 // T)
    if B >= 2:
        max_spt = min(max_spt, B // 2)
    spt = 1
    for c in range(1, max(1, max_spt) + 1):
        if B % c == 0:
            spt = c
    return spt


def bottle2neck_forward(x, P, cfg):
    B, C_in, T = x.shape
    assert C_in == cfg["inplanes"]
    # TODO(synk): MaxPool1d(pool) path not implemented (module default pool=False).
    assert not cfg.get("pool", False)

    k = cfg["kernel_size"]
    scale = cfg["scale"]
    planes = cfg["planes"]
    width = planes // scale
    nums = scale - 1
    c_mid = width * scale
    identity_residual = (C_in == planes)

    spt = _pick_samples_per_tile(B, T)
    L = spt * T
    n_tiles = B // spt

    # --- fold BN (eval mode) and pack all per-channel constants into one matrix ------
    bn1_s, bn1_h = _bn_affine(P["bn1"])
    bn3_s, bn3_h = _bn_affine(P["bn3"])
    bm_s = P["bnmid"]["gamma"] / jnp.sqrt(P["bnmid"]["var"] + BN_EPS)   # (nums, width)
    bm_h = P["bnmid"]["beta"] - P["bnmid"]["mean"] * bm_s

    rows = max(c_mid, planes)

    def colpad(v):
        v = jnp.asarray(v, jnp.float32).reshape(-1)
        return jnp.pad(v, (0, rows - v.shape[0]))

    constmat = jnp.stack([
        colpad(P["b1"]), colpad(bn1_s), colpad(bn1_h),
        colpad(P["bmid"]), colpad(bm_s), colpad(bm_h),
        colpad(P["b3"]), colpad(bn3_s), colpad(bn3_h),
        colpad(P["afb"]), colpad(P["alpha"]),
    ], axis=1)                                                          # (rows, 11) f32

    # --- pack matmul weights (bf16 in HBM) --------------------------------------------
    if identity_residual:
        w1res = P["w1"]
    else:
        w1res = jnp.concatenate([P["w1"], P["wres"]], axis=0)           # (c_mid+planes, C_in)
    w1res = w1res.astype(jnp.bfloat16)
    # torch conv weight (nums, Cout, Cin, k) -> tap-major 2-D (nums, Cout, k*Cin)
    wmid2d = jnp.transpose(P["wmid"], (0, 1, 3, 2)).reshape(
        nums, width, k * width).astype(jnp.bfloat16)
    w3 = P["w3"].astype(jnp.bfloat16)
    afw = P["afw"].astype(jnp.bfloat16)

    # --- batch into lanes: (B, C, T) -> (C, B*T), sample-major lane order --------------
    x2d = jnp.transpose(x, (1, 0, 2)).reshape(C_in, B * T).astype(jnp.float32)

    in_specs = [
        pl.BlockSpec((C_in, L), lambda i: (0, i)),
        pl.BlockSpec(w1res.shape, lambda i: (0, 0)),
        pl.BlockSpec(wmid2d.shape, lambda i: (0, 0, 0)),
        pl.BlockSpec(w3.shape, lambda i: (0, 0)),
        pl.BlockSpec(afw.shape, lambda i: (0, 0)),
        pl.BlockSpec(constmat.shape, lambda i: (0, 0)),
    ]

    flops = (2 * B * T * (C_in * (c_mid + (0 if identity_residual else planes))
                          + nums * width * k * width + c_mid * planes)
             + 2 * B * planes * planes)
    bytes_accessed = (x2d.size * 4 + B * planes * T * 4
                      + w1res.size * 2 + wmid2d.size * 2 + w3.size * 2 + afw.size * 2
                      + constmat.size * 4)

    out2d = pl.pallas_call(
        _make_kernel(cfg, T, spt, identity_residual),
        out_shape=jax.ShapeDtypeStruct((planes, B * T), jnp.float32),
        grid=(n_tiles,),
        in_specs=in_specs,
        out_specs=pl.BlockSpec((planes, L), lambda i: (0, i)),
        compiler_params=pltpu.CompilerParams(dimension_semantics=("parallel",)),
        cost_estimate=pl.CostEstimate(flops=flops, transcendentals=B * planes,
                                      bytes_accessed=bytes_accessed),
    )(x2d, w1res, wmid2d, w3, afw, constmat)

    return jnp.transpose(out2d.reshape(planes, B, T), (1, 0, 2))


# ----------------------------- pure-JAX reference (for validation) -------------------
def bottle2neck_ref(x, P, cfg):
    k = cfg["kernel_size"]
    dil = cfg["dilation"]
    scale = cfg["scale"]
    planes = cfg["planes"]
    width = planes // scale
    nums = scale - 1
    identity_residual = (cfg["inplanes"] == planes)

    def conv1x1(v, w, b=None):
        y = jnp.einsum("oc,bct->bot", w, v)
        return y if b is None else y + b[None, :, None]

    def bn_eval(v, g, bta, m, var):
        s = g / jnp.sqrt(var + BN_EPS)
        return v * s[None, :, None] + (bta - m * s)[None, :, None]

    residual = x if identity_residual else conv1x1(x, P["wres"])
    out = jax.nn.relu(conv1x1(x, P["w1"], P["b1"]))
    out = bn_eval(out, P["bn1"]["gamma"], P["bn1"]["beta"],
                  P["bn1"]["mean"], P["bn1"]["var"])
    spx = jnp.split(out, scale, axis=1)
    pad = (k // 2) * dil
    chunks = []
    sp = None
    for i in range(nums):
        sp = spx[i] if i == 0 else sp + spx[i]
        sp = jax.lax.conv_general_dilated(
            sp, P["wmid"][i], window_strides=(1,), padding=[(pad, pad)],
            rhs_dilation=(dil,), dimension_numbers=("NCH", "OIH", "NCH"))
        sp = sp + P["bmid"][i][None, :, None]
        sp = jax.nn.relu(sp)
        sp = bn_eval(sp, P["bnmid"]["gamma"][i], P["bnmid"]["beta"][i],
                     P["bnmid"]["mean"][i], P["bnmid"]["var"][i])
        chunks.append(sp)
    chunks.append(spx[nums])
    out = jnp.concatenate(chunks, axis=1)
    out = jax.nn.relu(conv1x1(out, P["w3"], P["b3"]))
    out = bn_eval(out, P["bn3"]["gamma"], P["bn3"]["beta"],
                  P["bn3"]["mean"], P["bn3"]["var"])
    out = out + residual
    # AFMS
    y = jnp.mean(out, axis=2)
    y = jax.nn.sigmoid(y @ P["afw"].T + P["afb"][None, :])
    return (out + P["alpha"][None, :, :]) * y[:, :, None]


# ----------------------------- parameter init ----------------------------------------
def init_params(key, cfg):
    keys = iter(jax.random.split(key, 64))

    def nrm(shape, s=0.2):
        return s * jax.random.normal(next(keys), shape, jnp.float32)

    def bn(shape):
        return dict(gamma=1.0 + nrm(shape, 0.1), beta=nrm(shape, 0.1),
                    mean=nrm(shape, 0.1),
                    var=1.0 + 0.1 * jax.random.uniform(next(keys), shape, jnp.float32))

    k = cfg["kernel_size"]
    scale = cfg["scale"]
    planes = cfg["planes"]
    c_in = cfg["inplanes"]
    width = planes // scale
    nums = scale - 1
    c_mid = width * scale

    P = dict(
        w1=nrm((c_mid, c_in)), b1=nrm((c_mid,)), bn1=bn((c_mid,)),
        wmid=nrm((nums, width, width, k)), bmid=nrm((nums, width)),
        bnmid=bn((nums, width)),
        w3=nrm((planes, c_mid)), b3=nrm((planes,)), bn3=bn((planes,)),
        alpha=1.0 + nrm((planes, 1), 0.1),
        afw=nrm((planes, planes)), afb=nrm((planes,)),
    )
    if c_in != planes:
        P["wres"] = nrm((planes, c_in))      # residual 1x1 conv, bias=False
    return P


# ----------------------------- demo --------------------------------------------------
if __name__ == "__main__":
    cfg = dict(inplanes=16, planes=32, kernel_size=3, dilation=2, scale=4, pool=False)
    T = 128

    key = jax.random.PRNGKey(0)
    kx1, kx2, kp = jax.random.split(key, 3)
    P = init_params(kp, cfg)

    # B=2 -> 1 sample/tile (2 grid steps); B=8 -> 4 samples/tile (512-lane tiles,
    # exercises cross-sample roll masking + segmented AFMS).
    for B, kx in ((2, kx1), (8, kx2)):
        x = jax.random.normal(kx, (B, cfg["inplanes"], T), jnp.float32)
        out = jax.block_until_ready(bottle2neck_forward(x, P, cfg))

        assert out.shape == (B, cfg["planes"], T), out.shape
        assert bool(jnp.all(jnp.isfinite(out)))

        ref = bottle2neck_ref(x, P, cfg)
        err = float(jnp.max(jnp.abs(out - ref)))
        rel = err / (float(jnp.max(jnp.abs(ref))) + 1e-6)
        # bf16 matmul operands (f32 accumulation) -> relative tolerance; layout/shift
        # bugs would produce O(1) relative error.
        assert rel < 3e-2, f"B={B}: max abs err {err}, rel {rel}"

    print("KERNEL_OK")
</pallas_src>

<mosaic_0001>
module attributes {stable_mosaic.version = 11 : i64} {
  func.func @kernel(%arg0: i32, %arg1: memref<16x128xf32, #tpu.memory_space<vmem>>, %arg2: memref<64x16xbf16, #tpu.memory_space<vmem>>, %arg3: memref<3x8x24xbf16, #tpu.memory_space<vmem>>, %arg4: memref<32x32xbf16, #tpu.memory_space<vmem>>, %arg5: memref<32x32xbf16, #tpu.memory_space<vmem>>, %arg6: memref<32x11xf32, #tpu.memory_space<vmem>>, %arg7: memref<32x128xf32, #tpu.memory_space<vmem>>) attributes {dimension_semantics = [#tpu.dimension_semantics<parallel>], iteration_bounds = array<i64: 2>, scalar_prefetch = 0 : i64, scratch_operands = 0 : i64, tpu.core_type = #tpu.core_type<tc>, window_params = [{transform_indices = @transform_0, window_bounds = array<i64: 16, 128>}, {pipeline_mode = #tpu.pipeline_mode<synchronous>, transform_indices = @transform_1, window_bounds = array<i64: 64, 16>}, {pipeline_mode = #tpu.pipeline_mode<synchronous>, transform_indices = @transform_2, window_bounds = array<i64: 3, 8, 24>}, {pipeline_mode = #tpu.pipeline_mode<synchronous>, transform_indices = @transform_3, window_bounds = array<i64: 32, 32>}, {pipeline_mode = #tpu.pipeline_mode<synchronous>, transform_indices = @transform_4, window_bounds = array<i64: 32, 32>}, {pipeline_mode = #tpu.pipeline_mode<synchronous>, transform_indices = @transform_5, window_bounds = array<i64: 32, 11>}, {transform_indices = @transform_6, window_bounds = array<i64: 32, 128>}]} {
    %c0 = arith.constant 0 : index
    %c0_0 = arith.constant 0 : index
    %0 = vector.load %arg1[%c0, %c0_0] : memref<16x128xf32, #tpu.memory_space<vmem>>, vector<16x128xf32>
    %c0_1 = arith.constant 0 : index
    %c0_2 = arith.constant 0 : index
    %1 = vector.load %arg6[%c0_1, %c0_2] : memref<32x11xf32, #tpu.memory_space<vmem>>, vector<32x11xf32>
    %2 = vector.extract_strided_slice %1 {offsets = [0, 0], sizes = [32, 1], strides = [1, 1]} : vector<32x11xf32> to vector<32x1xf32>
    %3 = vector.extract_strided_slice %1 {offsets = [0, 1], sizes = [32, 1], strides = [1, 1]} : vector<32x11xf32> to vector<32x1xf32>
    %4 = vector.extract_strided_slice %1 {offsets = [0, 2], sizes = [32, 1], strides = [1, 1]} : vector<32x11xf32> to vector<32x1xf32>
    %5 = vector.extract_strided_slice %1 {offsets = [0, 6], sizes = [32, 1], strides = [1, 1]} : vector<32x11xf32> to vector<32x1xf32>
    %6 = vector.extract_strided_slice %1 {offsets = [0, 7], sizes = [32, 1], strides = [1, 1]} : vector<32x11xf32> to vector<32x1xf32>
    %7 = vector.extract_strided_slice %1 {offsets = [0, 8], sizes = [32, 1], strides = [1, 1]} : vector<32x11xf32> to vector<32x1xf32>
    %8 = vector.extract_strided_slice %1 {offsets = [0, 9], sizes = [32, 1], strides = [1, 1]} : vector<32x11xf32> to vector<32x1xf32>
    %9 = vector.extract_strided_slice %1 {offsets = [0, 10], sizes = [32, 1], strides = [1, 1]} : vector<32x11xf32> to vector<32x1xf32>
    %c0_3 = arith.constant 0 : index
    %c0_4 = arith.constant 0 : index
    %10 = vector.load %arg2[%c0_3, %c0_4] : memref<64x16xbf16, #tpu.memory_space<vmem>>, vector<64x16xbf16>
    %11 = arith.truncf %0 : vector<16x128xf32> to vector<16x128xbf16>
    %cst = arith.constant dense<0.000000e+00> : vector<64x128xf32>
    %12 = tpu.matmul %10, %11, %cst {dimension_numbers = #tpu.dot_dimension_numbers<[1], [0], [0], [1], [0, 0, 1, 1], [], []>} : vector<64x16xbf16>, vector<16x128xbf16>, vector<64x128xf32> -> vector<64x128xf32>
    %13 = vector.extract_strided_slice %12 {offsets = [0, 0], sizes = [32, 128], strides = [1, 1]} : vector<64x128xf32> to vector<32x128xf32>
    %14 = vector.broadcast %2 : vector<32x1xf32> to vector<32x128xf32>
    %15 = arith.addf %13, %14 : vector<32x128xf32>
    %16 = vector.extract_strided_slice %12 {offsets = [32, 0], sizes = [32, 128], strides = [1, 1]} : vector<64x128xf32> to vector<32x128xf32>
    %cst_5 = arith.constant 0.000000e+00 : f32
    %17 = vector.broadcast %cst_5 : f32 to vector<32x128xf32>
    %18 = arith.maximumf %15, %17 : vector<32x128xf32>
    %19 = vector.broadcast %3 : vector<32x1xf32> to vector<32x128xf32>
    %20 = arith.mulf %18, %19 : vector<32x128xf32>
    %21 = vector.broadcast %4 : vector<32x1xf32> to vector<32x128xf32>
    %22 = arith.addf %20, %21 : vector<32x128xf32>
    %23 = tpu.iota {dimensions = array<i32: 1>} : vector<8x128xi32>
    %c128_i32 = arith.constant 128 : i32
    %c0_i32 = arith.constant 0 : i32
    %24 = arith.cmpi eq, %c128_i32, %c0_i32 : i32
    %c1_i32 = arith.constant 1 : i32
    %25 = arith.select %24, %c1_i32, %c128_i32 : i32
    %26 = vector.broadcast %25 : i32 to vector<8x128xi32>
    %27 = arith.remsi %23, %26 : vector<8x128xi32>
    %c0_i32_6 = arith.constant 0 : i32
    %28 = vector.broadcast %c0_i32_6 : i32 to vector<8x128xi32>
    %29 = arith.cmpi ne, %27, %28 : vector<8x128xi32>
    %c0_i32_7 = arith.constant 0 : i32
    %30 = vector.broadcast %c0_i32_7 : i32 to vector<8x128xi32>
    %31 = arith.cmpi slt, %27, %30 : vector<8x128xi32>
    %c0_i32_8 = arith.constant 0 : i32
    %32 = arith.cmpi slt, %25, %c0_i32_8 : i32
    %33 = vector.broadcast %32 : i1 to vector<8x128xi1>
    %34 = vector.broadcast %33 : vector<8x128xi1> to vector<8x128xi1>
    %35 = arith.xori %31, %34 : vector<8x128xi1>
    %36 = arith.andi %35, %29 : vector<8x128xi1>
    %37 = vector.broadcast %25 : i32 to vector<8x128xi32>
    %38 = arith.addi %27, %37 : vector<8x128xi32>
    %39 = arith.select %36, %38, %27 : vector<8x128xi1>, vector<8x128xi32>
    %c2_i32 = arith.constant 2 : i32
    %40 = vector.broadcast %c2_i32 : i32 to vector<8x128xi32>
    %41 = arith.cmpi sge, %39, %40 : vector<8x128xi32>
    %c126_i32 = arith.constant 126 : i32
    %42 = vector.broadcast %c126_i32 : i32 to vector<8x128xi32>
    %43 = arith.cmpi slt, %39, %42 : vector<8x128xi32>
    %44 = vector.extract_strided_slice %22 {offsets = [0, 0], sizes = [8, 128], strides = [1, 1]} : vector<32x128xf32> to vector<8x128xf32>
    %c2_i32_9 = arith.constant 2 : i32
    %45 = tpu.dynamic_rotate %44 by %c2_i32_9 dim 1 : vector<8x128xf32>, i32 -> vector<8x128xf32>
    %cst_10 = arith.constant 0.000000e+00 : f32
    %46 = vector.broadcast %cst_10 : f32 to vector<8x128xf32>
    %47 = arith.select %41, %45, %46 : vector<8x128xi1>, vector<8x128xf32>
    %c126_i32_11 = arith.constant 126 : i32
    %48 = tpu.dynamic_rotate %44 by %c126_i32_11 dim 1 : vector<8x128xf32>, i32 -> vector<8x128xf32>
    %cst_12 = arith.constant 0.000000e+00 : f32
    %49 = vector.broadcast %cst_12 : f32 to vector<8x128xf32>
    %50 = arith.select %43, %48, %49 : vector<8x128xi1>, vector<8x128xf32>
    %51 = tpu.concatenate %47, %44, %50 in 0 : vector<8x128xf32>, vector<8x128xf32>, vector<8x128xf32> -> vector<24x128xf32>
    %c0_13 = arith.constant 0 : index
    %c0_14 = arith.constant 0 : index
    %c0_15 = arith.constant 0 : index
    %52 = vector.load %arg3[%c0_13, %c0_14, %c0_15] : memref<3x8x24xbf16, #tpu.memory_space<vmem>>, vector<1x8x24xbf16>
    %53 = vector.shape_cast %52 : vector<1x8x24xbf16> to vector<8x24xbf16>
    %54 = arith.truncf %51 : vector<24x128xf32> to vector<24x128xbf16>
    %cst_16 = arith.constant dense<0.000000e+00> : vector<8x128xf32>
    %55 = tpu.matmul %53, %54, %cst_16 {dimension_numbers = #tpu.dot_dimension_numbers<[1], [0], [0], [1], [0, 0, 1, 1], [], []>} : vector<8x24xbf16>, vector<24x128xbf16>, vector<8x128xf32> -> vector<8x128xf32>
    %56 = vector.extract_strided_slice %1 {offsets = [0, 3], sizes = [8, 1], strides = [1, 1]} : vector<32x11xf32> to vector<8x1xf32>
    %57 = vector.broadcast %56 : vector<8x1xf32> to vector<8x128xf32>
    %58 = arith.addf %55, %57 : vector<8x128xf32>
    %cst_17 = arith.constant 0.000000e+00 : f32
    %59 = vector.broadcast %cst_17 : f32 to vector<8x128xf32>
    %60 = arith.maximumf %58, %59 : vector<8x128xf32>
    %61 = vector.extract_strided_slice %1 {offsets = [0, 4], sizes = [8, 1], strides = [1, 1]} : vector<32x11xf32> to vector<8x1xf32>
    %62 = vector.broadcast %61 : vector<8x1xf32> to vector<8x128xf32>
    %63 = arith.mulf %60, %62 : vector<8x128xf32>
    %64 = vector.extract_strided_slice %1 {offsets = [0, 5], sizes = [8, 1], strides = [1, 1]} : vector<32x11xf32> to vector<8x1xf32>
    %65 = vector.broadcast %64 : vector<8x1xf32> to vector<8x128xf32>
    %66 = arith.addf %63, %65 : vector<8x128xf32>
    %67 = vector.extract_strided_slice %22 {offsets = [8, 0], sizes = [8, 128], strides = [1, 1]} : vector<32x128xf32> to vector<8x128xf32>
    %68 = arith.addf %66, %67 : vector<8x128xf32>
    %c2_i32_18 = arith.constant 2 : i32
    %69 = tpu.dynamic_rotate %68 by %c2_i32_18 dim 1 : vector<8x128xf32>, i32 -> vector<8x128xf32>
    %cst_19 = arith.constant 0.000000e+00 : f32
    %70 = vector.broadcast %cst_19 : f32 to vector<8x128xf32>
    %71 = arith.select %41, %69, %70 : vector<8x128xi1>, vector<8x128xf32>
    %c126_i32_20 = arith.constant 126 : i32
    %72 = tpu.dynamic_rotate %68 by %c126_i32_20 dim 1 : vector<8x128xf32>, i32 -> vector<8x128xf32>
    %cst_21 = arith.constant 0.000000e+00 : f32
    %73 = vector.broadcast %cst_21 : f32 to vector<8x128xf32>
    %74 = arith.select %43, %72, %73 : vector<8x128xi1>, vector<8x128xf32>
    %75 = tpu.concatenate %71, %68, %74 in 0 : vector<8x128xf32>, vector<8x128xf32>, vector<8x128xf32> -> vector<24x128xf32>
    %c1 = arith.constant 1 : index
    %c0_22 = arith.constant 0 : index
    %c0_23 = arith.constant 0 : index
    %76 = vector.load %arg3[%c1, %c0_22, %c0_23] : memref<3x8x24xbf16, #tpu.memory_space<vmem>>, vector<1x8x24xbf16>
    %77 = vector.shape_cast %76 : vector<1x8x24xbf16> to vector<8x24xbf16>
    %78 = arith.truncf %75 : vector<24x128xf32> to vector<24x128xbf16>
    %cst_24 = arith.constant dense<0.000000e+00> : vector<8x128xf32>
    %79 = tpu.matmul %77, %78, %cst_24 {dimension_numbers = #tpu.dot_dimension_numbers<[1], [0], [0], [1], [0, 0, 1, 1], [], []>} : vector<8x24xbf16>, vector<24x128xbf16>, vector<8x128xf32> -> vector<8x128xf32>
    %80 = vector.extract_strided_slice %1 {offsets = [8, 3], sizes = [8, 1], strides = [1, 1]} : vector<32x11xf32> to vector<8x1xf32>
    %81 = vector.broadcast %80 : vector<8x1xf32> to vector<8x128xf32>
    %82 = arith.addf %79, %81 : vector<8x128xf32>
    %cst_25 = arith.constant 0.000000e+00 : f32
    %83 = vector.broadcast %cst_25 : f32 to vector<8x128xf32>
    %84 = arith.maximumf %82, %83 : vector<8x128xf32>
    %85 = vector.extract_strided_slice %1 {offsets = [8, 4], sizes = [8, 1], strides = [1, 1]} : vector<32x11xf32> to vector<8x1xf32>
    %86 = vector.broadcast %85 : vector<8x1xf32> to vector<8x128xf32>
    %87 = arith.mulf %84, %86 : vector<8x128xf32>
    %88 = vector.extract_strided_slice %1 {offsets = [8, 5], sizes = [8, 1], strides = [1, 1]} : vector<32x11xf32> to vector<8x1xf32>
    %89 = vector.broadcast %88 : vector<8x1xf32> to vector<8x128xf32>
    %90 = arith.addf %87, %89 : vector<8x128xf32>
    %91 = vector.extract_strided_slice %22 {offsets = [16, 0], sizes = [8, 128], strides = [1, 1]} : vector<32x128xf32> to vector<8x128xf32>
    %92 = arith.addf %90, %91 : vector<8x128xf32>
    %c2_i32_26 = arith.constant 2 : i32
    %93 = tpu.dynamic_rotate %92 by %c2_i32_26 dim 1 : vector<8x128xf32>, i32 -> vector<8x128xf32>
    %cst_27 = arith.constant 0.000000e+00 : f32
    %94 = vector.broadcast %cst_27 : f32 to vector<8x128xf32>
    %95 = arith.select %41, %93, %94 : vector<8x128xi1>, vector<8x128xf32>
    %c126_i32_28 = arith.constant 126 : i32
    %96 = tpu.dynamic_rotate %92 by %c126_i32_28 dim 1 : vector<8x128xf32>, i32 -> vector<8x128xf32>
    %cst_29 = arith.constant 0.000000e+00 : f32
    %97 = vector.broadcast %cst_29 : f32 to vector<8x128xf32>
    %98 = arith.select %43, %96, %97 : vector<8x128xi1>, vector<8x128xf32>
    %99 = tpu.concatenate %95, %92, %98 in 0 : vector<8x128xf32>, vector<8x128xf32>, vector<8x128xf32> -> vector<24x128xf32>
    %c2 = arith.constant 2 : index
    %c0_30 = arith.constant 0 : index
    %c0_31 = arith.constant 0 : index
    %100 = vector.load %arg3[%c2, %c0_30, %c0_31] : memref<3x8x24xbf16, #tpu.memory_space<vmem>>, vector<1x8x24xbf16>
    %101 = vector.shape_cast %100 : vector<1x8x24xbf16> to vector<8x24xbf16>
    %102 = arith.truncf %99 : vector<24x128xf32> to vector<24x128xbf16>
    %cst_32 = arith.constant dense<0.000000e+00> : vector<8x128xf32>
    %103 = tpu.matmul %101, %102, %cst_32 {dimension_numbers = #tpu.dot_dimension_numbers<[1], [0], [0], [1], [0, 0, 1, 1], [], []>} : vector<8x24xbf16>, vector<24x128xbf16>, vector<8x128xf32> -> vector<8x128xf32>
    %104 = vector.extract_strided_slice %1 {offsets = [16, 3], sizes = [8, 1], strides = [1, 1]} : vector<32x11xf32> to vector<8x1xf32>
    %105 = vector.broadcast %104 : vector<8x1xf32> to vector<8x128xf32>
    %106 = arith.addf %103, %105 : vector<8x128xf32>
    %cst_33 = arith.constant 0.000000e+00 : f32
    %107 = vector.broadcast %cst_33 : f32 to vector<8x128xf32>
    %108 = arith.maximumf %106, %107 : vector<8x128xf32>
    %109 = vector.extract_strided_slice %1 {offsets = [16, 4], sizes = [8, 1], strides = [1, 1]} : vector<32x11xf32> to vector<8x1xf32>
    %110 = vector.broadcast %109 : vector<8x1xf32> to vector<8x128xf32>
    %111 = arith.mulf %108, %110 : vector<8x128xf32>
    %112 = vector.extract_strided_slice %1 {offsets = [16, 5], sizes = [8, 1], strides = [1, 1]} : vector<32x11xf32> to vector<8x1xf32>
    %113 = vector.broadcast %112 : vector<8x1xf32> to vector<8x128xf32>
    %114 = arith.addf %111, %113 : vector<8x128xf32>
    %115 = vector.extract_strided_slice %22 {offsets = [24, 0], sizes = [8, 128], strides = [1, 1]} : vector<32x128xf32> to vector<8x128xf32>
    %116 = tpu.concatenate %66, %90, %114, %115 in 0 : vector<8x128xf32>, vector<8x128xf32>, vector<8x128xf32>, vector<8x128xf32> -> vector<32x128xf32>
    %c0_34 = arith.constant 0 : index
    %c0_35 = arith.constant 0 : index
    %117 = vector.load %arg4[%c0_34, %c0_35] : memref<32x32xbf16, #tpu.memory_space<vmem>>, vector<32x32xbf16>
    %118 = arith.truncf %116 : vector<32x128xf32> to vector<32x128xbf16>
    %cst_36 = arith.constant dense<0.000000e+00> : vector<32x128xf32>
    %119 = tpu.matmul %117, %118, %cst_36 {dimension_numbers = #tpu.dot_dimension_numbers<[1], [0], [0], [1], [0, 0, 1, 1], [], []>} : vector<32x32xbf16>, vector<32x128xbf16>, vector<32x128xf32> -> vector<32x128xf32>
    %120 = vector.broadcast %5 : vector<32x1xf32> to vector<32x128xf32>
    %121 = arith.addf %119, %120 : vector<32x128xf32>
    %cst_37 = arith.constant 0.000000e+00 : f32
    %122 = vector.broadcast %cst_37 : f32 to vector<32x128xf32>
    %123 = arith.maximumf %121, %122 : vector<32x128xf32>
    %124 = vector.broadcast %6 : vector<32x1xf32> to vector<32x128xf32>
    %125 = arith.mulf %123, %124 : vector<32x128xf32>
    %126 = vector.broadcast %7 : vector<32x1xf32> to vector<32x128xf32>
    %127 = arith.addf %125, %126 : vector<32x128xf32>
    %128 = arith.addf %127, %16 : vector<32x128xf32>
    %cst_38 = arith.constant dense<0.000000e+00> : vector<32xf32>
    %129 = vector.multi_reduction <add>, %128, %cst_38 [1] : vector<32x128xf32> to vector<32xf32>
    %130 = vector.shape_cast %129 : vector<32xf32> to vector<32x1xf32>
    %cst_39 = arith.constant 7.812500e-03 : f32
    %131 = vector.broadcast %cst_39 : f32 to vector<32x1xf32>
    %132 = arith.mulf %130, %131 : vector<32x1xf32>
    %c0_40 = arith.constant 0 : index
    %c0_41 = arith.constant 0 : index
    %133 = vector.load %arg5[%c0_40, %c0_41] : memref<32x32xbf16, #tpu.memory_space<vmem>>, vector<32x32xbf16>
    %134 = arith.truncf %132 : vector<32x1xf32> to vector<32x1xbf16>
    %cst_42 = arith.constant dense<0.000000e+00> : vector<32x1xf32>
    %135 = tpu.matmul %133, %134, %cst_42 {dimension_numbers = #tpu.dot_dimension_numbers<[1], [0], [0], [1], [0, 0, 1, 1], [], []>} : vector<32x32xbf16>, vector<32x1xbf16>, vector<32x1xf32> -> vector<32x1xf32>
    %136 = arith.addf %135, %8 : vector<32x1xf32>
    %137 = arith.negf %136 : vector<32x1xf32>
    %138 = math.exp %137 : vector<32x1xf32>
    %cst_43 = arith.constant 1.000000e+00 : f32
    %139 = vector.broadcast %cst_43 : f32 to vector<32x1xf32>
    %140 = arith.addf %139, %138 : vector<32x1xf32>
    %141 = arith.divf %139, %140 : vector<32x1xf32>
    %142 = vector.broadcast %9 : vector<32x1xf32> to vector<32x128xf32>
    %143 = arith.addf %128, %142 : vector<32x128xf32>
    %144 = vector.broadcast %141 : vector<32x1xf32> to vector<32x128xf32>
    %145 = arith.mulf %143, %144 : vector<32x128xf32>
    %c0_44 = arith.constant 0 : index
    %c0_45 = arith.constant 0 : index
    %146 = vector.load %arg7[%c0_44, %c0_45] : memref<32x128xf32, #tpu.memory_space<vmem>>, vector<32x128xf32>
    tpu.vector_store %arg7[%c0_44, %c0_45], %145 {strides = array<i32>} : memref<32x128xf32, #tpu.memory_space<vmem>>, vector<32x128xf32>,
    return
  }
  func.func @transform_0(%arg0: i32) -> (i32, i32) {
    %c0_i32 = arith.constant 0 : i32
    %c0_i32_0 = arith.constant 0 : i32
    return %c0_i32, %arg0 : i32, i32
  }
  func.func @transform_1(%arg0: i32) -> (i32, i32) {
    %c0_i32 = arith.constant 0 : i32
    %c0_i32_0 = arith.constant 0 : i32
    %c0_i32_1 = arith.constant 0 : i32
    return %c0_i32, %c0_i32_0 : i32, i32
  }
  func.func @transform_2(%arg0: i32) -> (i32, i32, i32) {
    %c0_i32 = arith.constant 0 : i32
    %c0_i32_0 = arith.constant 0 : i32
    %c0_i32_1 = arith.constant 0 : i32
    %c0_i32_2 = arith.constant 0 : i32
    return %c0_i32, %c0_i32_0, %c0_i32_1 : i32, i32, i32
  }
  func.func @transform_3(%arg0: i32) -> (i32, i32) {
    %c0_i32 = arith.constant 0 : i32
    %c0_i32_0 = arith.constant 0 : i32
    %c0_i32_1 = arith.constant 0 : i32
    return %c0_i32, %c0_i32_0 : i32, i32
  }
  func.func @transform_4(%arg0: i32) -> (i32, i32) {
    %c0_i32 = arith.constant 0 : i32
    %c0_i32_0 = arith.constant 0 : i32
    %c0_i32_1 = arith.constant 0 : i32
    return %c0_i32, %c0_i32_0 : i32, i32
  }
  func.func @transform_5(%arg0: i32) -> (i32, i32) {
    %c0_i32 = arith.constant 0 : i32
    %c0_i32_0 = arith.constant 0 : i32
    %c0_i32_1 = arith.constant 0 : i32
    return %c0_i32, %c0_i32_0 : i32, i32
  }
  func.func @transform_6(%arg0: i32) -> (i32, i32) {
    %c0_i32 = arith.constant 0 : i32
    %c0_i32_0 = arith.constant 0 : i32
    return %c0_i32, %arg0 : i32, i32
  }
}

</mosaic_0001>

<llo_original>
// kernel: tpu_custom_call.1
$region0: #{tpu_custom_call.1}
  #allocation0 [shape = 'u32[]', space=smem, size = 0x4, offset = 0x4, fixed_abs, tag = 'smem constant byte address 0x4 - core index']
  #allocation1 [shape = 'u32[144,128]{1,0:T(1,128)}', space=vmem, size = 0x12000, scoped, tag = 'internal scratch']
  %s0 = inlined_call_operand.vmem [shape: f32[16,256], index: 0, kind: input, shape index: {}]
  %s1 = inlined_call_operand.vmem [shape: bf16[64,16], index: 1, kind: input, shape index: {}]
  %s2 = inlined_call_operand.vmem [shape: bf16[3,8,24], index: 2, kind: input, shape index: {}]
  %s3 = inlined_call_operand.vmem [shape: bf16[32,32], index: 3, kind: input, shape index: {}]
  %s4 = inlined_call_operand.vmem [shape: bf16[32,32], index: 4, kind: input, shape index: {}]
  %s5 = inlined_call_operand.vmem [shape: f32[32,11], index: 5, kind: input, shape index: {}]
  %s6 = inlined_call_operand.hbm [shape: f32[32,256], index: 6, kind: output, shape index: {}]
  %s7 = sld [smem:[#allocation0]]
  $region95: #{tpu_custom_call.1} parent=0
    _
  %s9 = ssub.s32 1, %s7
  %s10 = scalar_select 0, %s9, %s7
  $region1: #{tpu_custom_call.1} parent=0
    #allocation2 [shape = 'u8[16384]{0}', space=vmem, size = 0x4000, scoped, tag = 'input window, operand 0']
    #allocation3 [shape = 'u8[32768]{0}', space=vmem, size = 0x8000, scoped, tag = 'output window, operand 0']
    #allocation4 [shape = 's32[2]{0}', space=sflag, size = 0x8, scoped, tag = 'scoped memory for tpu_custom_call.1']
    %11 = vsyncpa [#allocation4], 0
    %s12 = scalar_lea.sflag [#allocation4], 1
    %13 = vsyncpa %s12, 0
    loop: start=0, step=1, limit=4
    $region2: #{tpu_custom_call.1} parent=1 // loop_pre_header
      _
    $region3: #{tpu_custom_call.1} parent=1 // loop_header
      %s15 = sphi 0, %s19
      %p16 = scmp.ge.s32.totalorder %s15, 4
      %s25 = sphi 0, %s27
      %s28 = sphi 0, %s25
      %s29 = sphi 0, %s28
      %s45 = sphi 0, %s29
      %s49 = sphi 0, %s49
      %s51 = sphi 0, %s49
      %s52 = sphi 0, %s51
      %s66 = sphi 0, %s52
      %s70 = sphi 0, %s70
      %s72 = sphi 0, %s70
      %s73 = sphi 0, %s72
      %s87 = sphi 0, %s73
      %s91 = sphi 0, %s91
      %s93 = sphi 0, %s91
      %s94 = sphi 0, %s93
      %s108 = sphi 0, %s94
      %s112 = sphi 0, %s112
      %s114 = sphi 0, %s112
      %s115 = sphi 0, %s114
      %s129 = sphi 0, %s115
      %s133 = sphi 0, %s133
      %s135 = sphi 0, %s133
      %s136 = sphi 0, %s135
      %s150 = sphi 0, %s136
      %s156 = sphi 0, %s158
      %s159 = sphi 0, %s156
      %s160 = sphi 0, %s159
      %s176 = sphi 0, %s160
    $region4: #{tpu_custom_call.1} parent=1 // loop_header_branch
      %18 = sbr.rel (%p16) target = $region8
    $region5: #{tpu_custom_call.1} parent=1 // loop_body
      %s20 = ssub.s32 %s15, 1
      %s21 = ssub.s32 %s15, 2
      %s22 = sadd.s32 %s15, 1
      %s23 = ssub.s32 %s15, %s22
      %p24 = scmp.eq.s32.totalorder %s23, 0
      %s26 = sadd.s32 %s25, 1
      %s27 = scalar_select %p24, %s25, %s26
      %p30 = pneg %p24
      %p31 = scmp.eq.s32.totalorder %s15, 1
      %p32 = por %p30, %p31
      %p33 = scmp.ne.s32.totalorder %s25, %s28
      %p34 = scmp.eq.s32.totalorder %s15, 0
      %p35 = por %p33, %p34
      %p36 = scmp.ne.s32.totalorder %s25, %s28
      %p37 = scmp.eq.s32.totalorder %s20, 1
      %p38 = por %p36, %p37
      %p39 = scmp.ne.s32.totalorder %s28, %s29
      %p40 = scmp.eq.s32.totalorder %s20, 0
      %p41 = por %p39, %p40
      %p42 = scmp.ne.s32.totalorder %s28, %s29
      %p43 = scmp.eq.s32.totalorder %s21, 1
      %p44 = por %p42, %p43
      %p46 = scmp.ne.s32.totalorder %s29, %s45
      %p47 = scmp.eq.s32.totalorder %s21, 0
      %p48 = por %p46, %p47
      %s50 = sadd.s32 %s49, 1
      %p53 = scmp.eq.s32.totalorder %s15, 1
      %p54 = scmp.ne.s32.totalorder %s49, %s51
      %p55 = scmp.eq.s32.totalorder %s15, 0
      %p56 = por %p54, %p55
      %p57 = scmp.ne.s32.totalorder %s49, %s51
      %p58 = scmp.eq.s32.totalorder %s20, 1
      %p59 = por %p57, %p58
      %p60 = scmp.ne.s32.totalorder %s51, %s52
      %p61 = scmp.eq.s32.totalorder %s20, 0
      %p62 = por %p60, %p61
      %p63 = scmp.ne.s32.totalorder %s51, %s52
      %p64 = scmp.eq.s32.totalorder %s21, 1
      %p65 = por %p63, %p64
      %p67 = scmp.ne.s32.totalorder %s52, %s66
      %p68 = scmp.eq.s32.totalorder %s21, 0
      %p69 = por %p67, %p68
      %s71 = sadd.s32 %s70, 1
      %p74 = scmp.eq.s32.totalorder %s15, 1
      %p75 = scmp.ne.s32.totalorder %s70, %s72
      %p76 = scmp.eq.s32.totalorder %s15, 0
      %p77 = por %p75, %p76
      %p78 = scmp.ne.s32.totalorder %s70, %s72
      %p79 = scmp.eq.s32.totalorder %s20, 1
      %p80 = por %p78, %p79
      %p81 = scmp.ne.s32.totalorder %s72, %s73
      %p82 = scmp.eq.s32.totalorder %s20, 0
      %p83 = por %p81, %p82
      %p84 = scmp.ne.s32.totalorder %s72, %s73
      %p85 = scmp.eq.s32.totalorder %s21, 1
      %p86 = por %p84, %p85
      %p88 = scmp.ne.s32.totalorder %s73, %s87
      %p89 = scmp.eq.s32.totalorder %s21, 0
      %p90 = por %p88, %p89
      %s92 = sadd.s32 %s91, 1
      %p95 = scmp.eq.s32.totalorder %s15, 1
      %p96 = scmp.ne.s32.totalorder %s91, %s93
      %p97 = scmp.eq.s32.totalorder %s15, 0
      %p98 = por %p96, %p97
      %p99 = scmp.ne.s32.totalorder %s91, %s93
      %p100 = scmp.eq.s32.totalorder %s20, 1
      %p101 = por %p99, %p100
      %p102 = scmp.ne.s32.totalorder %s93, %s94
      %p103 = scmp.eq.s32.totalorder %s20, 0
      %p104 = por %p102, %p103
      %p105 = scmp.ne.s32.totalorder %s93, %s94
      %p106 = scmp.eq.s32.totalorder %s21, 1
      %p107 = por %p105, %p106
      %p109 = scmp.ne.s32.totalorder %s94, %s108
      %p110 = scmp.eq.s32.totalorder %s21, 0
      %p111 = por %p109, %p110
      %s113 = sadd.s32 %s112, 1
      %p116 = scmp.eq.s32.totalorder %s15, 1
      %p117 = scmp.ne.s32.totalorder %s112, %s114
      %p118 = scmp.eq.s32.totalorder %s15, 0
      %p119 = por %p117, %p118
      %p120 = scmp.ne.s32.totalorder %s112, %s114
      %p121 = scmp.eq.s32.totalorder %s20, 1
      %p122 = por %p120, %p121
      %p123 = scmp.ne.s32.totalorder %s114, %s115
      %p124 = scmp.eq.s32.totalorder %s20, 0
      %p125 = por %p123, %p124
      %p126 = scmp.ne.s32.totalorder %s114, %s115
      %p127 = scmp.eq.s32.totalorder %s21, 1
      %p128 = por %p126, %p127
      %p130 = scmp.ne.s32.totalorder %s115, %s129
      %p131 = scmp.eq.s32.totalorder %s21, 0
      %p132 = por %p130, %p131
      %s134 = sadd.s32 %s133, 1
      %p137 = scmp.eq.s32.totalorder %s15, 1
      %p138 = scmp.ne.s32.totalorder %s133, %s135
      %p139 = scmp.eq.s32.totalorder %s15, 0
      %p140 = por %p138, %p139
      %p141 = scmp.ne.s32.totalorder %s133, %s135
      %p142 = scmp.eq.s32.totalorder %s20, 1
      %p143 = por %p141, %p142
      %p144 = scmp.ne.s32.totalorder %s135, %s136
      %p145 = scmp.eq.s32.totalorder %s20, 0
      %p146 = por %p144, %p145
      %p147 = scmp.ne.s32.totalorder %s135, %s136
      %p148 = scmp.eq.s32.totalorder %s21, 1
      %p149 = por %p147, %p148
      %p151 = scmp.ne.s32.totalorder %s136, %s150
      %p152 = scmp.eq.s32.totalorder %s21, 0
      %p153 = por %p151, %p152
      %s154 = ssub.s32 %s15, %s22
      %p155 = scmp.eq.s32.totalorder %s154, 0
      %s157 = sadd.s32 %s156, 1
      %s158 = scalar_select %p155, %s156, %s157
      %p161 = pneg %p155
      %p162 = scmp.eq.s32.totalorder %s15, 1
      %p163 = por %p161, %p162
      %p164 = scmp.ne.s32.totalorder %s156, %s159
      %p165 = scmp.eq.s32.totalorder %s15, 0
      %p166 = por %p164, %p165
      %p167 = scmp.ne.s32.totalorder %s156, %s159
      %p168 = scmp.eq.s32.totalorder %s20, 1
      %p169 = por %p167, %p168
      %p170 = scmp.ne.s32.totalorder %s159, %s160
      %p171 = scmp.eq.s32.totalorder %s20, 0
      %p172 = por %p170, %p171
      %p173 = scmp.ne.s32.totalorder %s159, %s160
      %p174 = scmp.eq.s32.totalorder %s21, 1
      %p175 = por %p173, %p174
      %p177 = scmp.ne.s32.totalorder %s160, %s176
      %p178 = scmp.eq.s32.totalorder %s21, 0
      %p179 = por %p177, %p178
      %p180 = scmp.le.s32.totalorder 1, %s15
      %p181 = scmp.lt.s32.totalorder %s15, 3
      %p182 = pnand %p180, %p181
      %p183 = pneg %p182
      // Predicated region
      $region9: #{tpu_custom_call.1} parent=5 // pred_check
        _
      $region10: #{tpu_custom_call.1} parent=5 // pred_check_branch
        %185 = sbr.rel (%p182) target = $region12
      $region11: #{tpu_custom_call.1} parent=5 // pred_region
        %s186 = ssub.s32 %s15, 1
        // Predicated region
        $region13: #{tpu_custom_call.1} parent=11 // pred_check
          %p187 = pneg %p62
        $region14: #{tpu_custom_call.1} parent=11 // pred_check_branch
          %189 = sbr.rel (%p187) target = $region16
        $region15: #{tpu_custom_call.1} parent=11 // pred_region
          _
        $region16: #{tpu_custom_call.1} parent=11 // pred_fallthru
          _
        // Predicated region
        $region17: #{tpu_custom_call.1} parent=11 // pred_check
          %p190 = pneg %p83
        $region18: #{tpu_custom_call.1} parent=11 // pred_check_branch
          %192 = sbr.rel (%p190) target = $region20
        $region19: #{tpu_custom_call.1} parent=11 // pred_region
          _
        $region20: #{tpu_custom_call.1} parent=11 // pred_fallthru
          _
        // Predicated region
        $region21: #{tpu_custom_call.1} parent=11 // pred_check
          %p193 = pneg %p104
        $region22: #{tpu_custom_call.1} parent=11 // pred_check_branch
          %195 = sbr.rel (%p193) target = $region24
        $region23: #{tpu_custom_call.1} parent=11 // pred_region
          _
        $region24: #{tpu_custom_call.1} parent=11 // pred_fallthru
          _
        // Predicated region
        $region25: #{tpu_custom_call.1} parent=11 // pred_check
          %p196 = pneg %p125
        $region26: #{tpu_custom_call.1} parent=11 // pred_check_branch
          %198 = sbr.rel (%p196) target = $region28
        $region27: #{tpu_custom_call.1} parent=11 // pred_region
          _
        $region28: #{tpu_custom_call.1} parent=11 // pred_fallthru
          _
        // Predicated region
        $region29: #{tpu_custom_call.1} parent=11 // pred_check
          %p199 = pneg %p146
        $region30: #{tpu_custom_call.1} parent=11 // pred_check_branch
          %201 = sbr.rel (%p199) target = $region32
        $region31: #{tpu_custom_call.1} parent=11 // pred_region
          _
        $region32: #{tpu_custom_call.1} parent=11 // pred_fallthru
          _
      $region12: #{tpu_custom_call.1} parent=5 // pred_fallthru
        _
      %p202 = scmp.lt.s32.totalorder %s15, 2
      // Predicated region
      $region33: #{tpu_custom_call.1} parent=5 // pred_check
        %p203 = pneg %p202
      $region34: #{tpu_custom_call.1} parent=5 // pred_check_branch
        %205 = sbr.rel (%p203) target = $region36
      $region35: #{tpu_custom_call.1} parent=5 // pred_region
        // Predicated region
        $region37: #{tpu_custom_call.1} parent=35 // pred_check
          %p206 = pneg %p35
        $region38: #{tpu_custom_call.1} parent=35 // pred_check_branch
          %208 = sbr.rel (%p206) target = $region40
        $region39: #{tpu_custom_call.1} parent=35 // pred_region
          %s209 = sand.u32 %s25, 1
          %s210 = sand.u32 %s25, 1
          %s211 = smul.addr %s210, 16
          %s212 = scalar_lea.vmem [#allocation2], %s211
          %s213 = smul.addr %s15, 8
          %s214 = scalar_lea.vmem %s0, %s213
          // Predicated region
          $region41: #{tpu_custom_call.1} parent=39 // pred_check
            _
          $region42: #{tpu_custom_call.1} parent=39 // pred_check_branch
            %216 = sbr.rel (0) target = $region44
          $region43: #{tpu_custom_call.1} parent=39 // pred_region
            // Predicated region
            $region45: #{tpu_custom_call.1} parent=43 // pred_check
              _
            $region46: #{tpu_custom_call.1} parent=43 // pred_check_branch
              %218 = sbr.rel (0) target = $region48
            $region47: #{tpu_custom_call.1} parent=43 // pred_region
              // Predicated region
              $region60: #{tpu_custom_call.1} parent=47 // pred_check
                _
              $region61: #{tpu_custom_call.1} parent=47 // pred_check_branch
                %235 = sbr.rel (0) target = $region63
              $region62: #{tpu_custom_call.1} parent=47 // pred_region
                loop: start=0, step=1, limit=1
                $region64: #{tpu_custom_call.1} parent=62 // loop_pre_header
                  _
                $region65: #{tpu_custom_call.1} parent=62 // loop_header
                  %s237 = sphi 0, %s241
                  %p238 = scmp.ge.s32.totalorder %s237, 1
                  %s242 = sphi %s214, %s214
                  %s243 = sphi %s212, %s212
                $region66: #{tpu_custom_call.1} parent=62 // loop_header_branch
                  %240 = sbr.rel (%p238) target = $region70
                $region67: #{tpu_custom_call.1} parent=62 // loop_body
                  %v244 = vld [vmem:[%s242] sm:$0xff]
                  %245 = vst [vmem:[%s243] sm:$0xff] %v244
                  %v246 = vld [vmem:[%s242 + $0x10] sm:$0xff]
                  %247 = vst [vmem:[%s243 + $0x8] sm:$0xff] %v246
                $region68: #{tpu_custom_call.1} parent=62 // loop_footer
                  %s241 = sadd.s32 1, %s237
                $region69: #{tpu_custom_call.1} parent=62 // loop_footer_branch
                  %236 = sbr.rel target = $region65
                $region70: #{tpu_custom_call.1} parent=62 // loop_exit
                  _
              $region63: #{tpu_custom_call.1} parent=47 // pred_fallthru
                _
              // Predicated region
              $region71: #{tpu_custom_call.1} parent=47 // pred_check
                _
              $region72: #{tpu_custom_call.1} parent=47 // pred_check_branch
                %249 = sbr.rel target = $region74
              $region73: #{tpu_custom_call.1} parent=47 // pred_region
                _
              $region74: #{tpu_custom_call.1} parent=47 // pred_fallthru
                _
            $region48: #{tpu_custom_call.1} parent=43 // pred_fallthru
              _
            // Predicated region
            $region49: #{tpu_custom_call.1} parent=43 // pred_check
              _
            $region50: #{tpu_custom_call.1} parent=43 // pred_check_branch
              %220 = sbr.rel target = $region52
            $region51: #{tpu_custom_call.1} parent=43 // pred_region
              loop: start=0, step=1, limit=1
              $region53: #{tpu_custom_call.1} parent=51 // loop_pre_header
                _
              $region54: #{tpu_custom_call.1} parent=51 // loop_header
                %s223 = sphi 0, %s227
                %p224 = scmp.ge.s32.totalorder %s223, 1
                %s228 = sphi %s214, %s214
                %s229 = sphi %s212, %s212
              $region55: #{tpu_custom_call.1} parent=51 // loop_header_branch
                %226 = sbr.rel (%p224) target = $region59
              $region56: #{tpu_custom_call.1} parent=51 // loop_body
                %v230 = vld [vmem:[%s228] sm:$0xff]
                %231 = vst [vmem:[%s229] sm:$0xff] %v230
                %v232 = vld [vmem:[%s228 + $0x10] sm:$0xff]
                %233 = vst [vmem:[%s229 + $0x8] sm:$0xff] %v232
              $region57: #{tpu_custom_call.1} parent=51 // loop_footer
                %s227 = sadd.s32 1, %s223
              $region58: #{tpu_custom_call.1} parent=51 // loop_footer_branch
                %222 = sbr.rel target = $region54
              $region59: #{tpu_custom_call.1} parent=51 // loop_exit
                _
            $region52: #{tpu_custom_call.1} parent=43 // pred_fallthru
              _
          $region44: #{tpu_custom_call.1} parent=39 // pred_fallthru
            _
          %250 = vnop
        $region40: #{tpu_custom_call.1} parent=35 // pred_fallthru
          _
      $region36: #{tpu_custom_call.1} parent=5 // pred_fallthru
        _
      %p251 = scmp.le.s32.totalorder 1, %s15
      %p252 = scmp.lt.s32.totalorder %s15, 3
      %p253 = pnand %p251, %p252
      %p254 = pneg %p253
      // Predicated region
      $region75: #{tpu_custom_call.1} parent=5 // pred_check
        _
      $region76: #{tpu_custom_call.1} parent=5 // pred_check_branch
        %256 = sbr.rel (%p253) target = $region78
      $region77: #{tpu_custom_call.1} parent=5 // pred_region
        %s257 = ssub.s32 %s15, 1
        %s258 = sand.u32 %s28, 1
        %s259 = sand.u32 %s28, 1
        %s260 = smul.addr %s259, 16
        %s261 = scalar_lea.vmem [#allocation2], %s260
        // Predicated region
        $region79: #{tpu_custom_call.1} parent=77 // pred_check
          %p262 = pneg %p41
        $region80: #{tpu_custom_call.1} parent=77 // pred_check_branch
          %264 = sbr.rel (%p262) target = $region82
        $region81: #{tpu_custom_call.1} parent=77 // pred_region
          _
        $region82: #{tpu_custom_call.1} parent=77 // pred_fallthru
          _
        %s265 = sand.u32 %s28, 1
        %s266 = sand.u32 %s28, 1
        %s267 = smul.addr %s266, 16
        %s268 = scalar_lea.vmem [#allocation2], %s267
        %p269 = pneg %p41
        %p270 = pneg %p38
        %p271 = pneg %p62
        %p272 = pneg %p59
        %p273 = pneg %p83
        %p274 = pneg %p80
        %p275 = pneg %p104
        %p276 = pneg %p101
        %p277 = pneg %p125
        %p278 = pneg %p122
        %p279 = pneg %p146
        %p280 = pneg %p143
        %p281 = pneg %p172
        %p282 = pneg %p169
        %s283 = sand.u32 %s159, 1
        %s284 = scalar_lea.sflag [#allocation4], %s283
        %s285 = sand.u32 %s159, 1
        %s286 = smul.addr %s285, 32
        %s287 = scalar_lea.vmem [#allocation3], %s286
        %v289 = vld [vmem:[%s261] sm:$0xff]
        %v290 = vld [vmem:[%s261 + $0x8] sm:$0xff]
        %v291 = vld [vmem:[%s5] sm:$0xff]
        %v292 = vld [vmem:[%s5 + $0x8] sm:$0xff]
        %v293 = vld [vmem:[%s5 + $0x10] sm:$0xff]
        %v294 = vld [vmem:[%s5 + $0x18] sm:$0xff]
        %v295 = vld [vmem:[%s1] sm:$0xf]
        %v296 = vld [vmem:[%s1 + $0x4] sm:$0xf]
        %v297 = vld [vmem:[%s1 + $0x8] sm:$0xf]
        %v298 = vld [vmem:[%s1 + $0xc] sm:$0xf]
        %v299 = vld [vmem:[%s1 + $0x10] sm:$0xf]
        %v300 = vld [vmem:[%s1 + $0x14] sm:$0xf]
        %v301 = vld [vmem:[%s1 + $0x18] sm:$0xf]
        %v302 = vld [vmem:[%s1 + $0x1c] sm:$0xf]
        %v303 = vpack.c.bf16 %v290, %v289
        %v312 = vunpack.c.l.b16 %v295
        %v313 = vunpack.c.l.b16 %v296
        %v314 = vunpack.c.l.b16 %v297
        %v315 = vunpack.c.l.b16 %v298
        %v316 = vunpack.c.l.b16 %v299
        %v317 = vunpack.c.l.b16 %v300
        %v318 = vunpack.c.l.b16 %v301
        %v319 = vunpack.c.l.b16 %v302
        %v320 = vpack.c.b16 %v313, %v312
        %v321 = vpack.c.b16 %v315, %v314
        %v322 = vpack.c.b16 %v317, %v316
        %v323 = vpack.c.b16 %v319, %v318
        %vm324 = vcmask 130048
        %v326 = vsel %vm324, %v320, 0
        %v329 = vsel %vm324, %v321, 0
        %v332 = vsel %vm324, %v322, 0
        %v335 = vsel %vm324, %v323, 0
        %337 = vmatprep.subr.bf16.mxu0 0
        %338 = vmatpush1.bf16.msra.mxu0 %v303
        %339 = vmatprep.subr.bf16.mxu0 0
        %340 = vmatpush1.bf16.msra.mxu0 0
        %341 = vmatprep.subr.bf16.mxu0 0
        %342 = vmatpush1.bf16.msra.mxu0 0
        %343 = vmatprep.subr.bf16.mxu0 0
        %344 = vmatpush1.bf16.msra.mxu0 0
        %345 = vmatprep.subr.bf16.mxu0 0
        %346 = vmatpush1.bf16.msra.mxu0 0
        %347 = vmatprep.subr.bf16.mxu0 0
        %348 = vmatpush1.bf16.msra.mxu0 0
        %349 = vmatprep.subr.bf16.mxu0 0
        %350 = vmatpush1.bf16.msra.mxu0 0
        %351 = vmatprep.subr.bf16.mxu0 0
        %352 = vmatpush1.bf16.msra.mxu0 0
        %353 = vmatprep.subr.bf16.mxu0 0
        %354 = vmatpush1.bf16.msra.mxu0 0
        %355 = vmatprep.subr.bf16.mxu0 0
        %356 = vmatpush1.bf16.msra.mxu0 0
        %357 = vmatprep.subr.bf16.mxu0 0
        %358 = vmatpush1.bf16.msra.mxu0 0
        %359 = vmatprep.subr.bf16.mxu0 0
        %360 = vmatpush1.bf16.msra.mxu0 0
        %361 = vmatprep.subr.bf16.mxu0 0
        %362 = vmatpush1.bf16.msra.mxu0 0
        %363 = vmatprep.subr.bf16.mxu0 0
        %364 = vmatpush1.bf16.msra.mxu0 0
        %365 = vmatprep.subr.bf16.mxu0 0
        %366 = vmatpush1.bf16.msra.mxu0 0
        %367 = vmatprep.subr.bf16.mxu0 0
        %368 = vmatpush1.bf16.msra.mxu0 0
        %369 = vmatprep.mubr.bf16.mxu0 0
        %370 = vmatmul.mubr.bf16.gmra.mrb[0].mxu0 %v326
        %v371 = vpop.f32.mrb[0].mxu0
        %v372 = vadd.f32 0.0, %v371
        %v373 = vpop.f32.mrb[0].mxu0
        %v374 = vpop.f32.mrb[0].mxu0
        %v375 = vadd.f32 0.0, %v374
        %v376 = vpop.f32.mrb[0].mxu0
        %377 = vmatprep.mubr.bf16.mxu0 0
        %378 = vmatmul.mubr.bf16.gmra.mrb[0].mxu0 %v329
        %v379 = vpop.f32.mrb[0].mxu0
        %v380 = vadd.f32 0.0, %v379
        %v381 = vpop.f32.mrb[0].mxu0
        %v382 = vpop.f32.mrb[0].mxu0
        %v383 = vadd.f32 0.0, %v382
        %v384 = vpop.f32.mrb[0].mxu0
        %385 = vmatprep.mubr.bf16.mxu0 0
        %386 = vmatmul.mubr.bf16.gmra.mrb[0].mxu0 %v332
        %v387 = vpop.f32.mrb[0].mxu0
        %v388 = vadd.f32 0.0, %v387
        %v389 = vpop.f32.mrb[0].mxu0
        %v390 = vpop.f32.mrb[0].mxu0
        %v391 = vadd.f32 0.0, %v390
        %v392 = vpop.f32.mrb[0].mxu0
        %393 = vmatprep.mubr.bf16.mxu0 0
        %394 = vmatmul.mubr.bf16.gmra.mrb[0].mxu0 %v335
        %v395 = vpop.f32.mrb[0].mxu0
        %v396 = vadd.f32 0.0, %v395
        %v397 = vpop.f32.mrb[0].mxu0
        %v398 = vpop.f32.mrb[0].mxu0
        %v399 = vadd.f32 0.0, %v398
        %v400 = vpop.f32.mrb[0].mxu0
        %401 = vdwg.mxu0
        %403 = vset.pattern.permute.xlu0 0
        %404 = vperm.xlu0 %403, %v291
        %v405 = vpop.permute.xlu0 %404
        %408 = vset.pattern.permute.xlu0 0
        %409 = vperm.xlu0 %408, %v292
        %v410 = vpop.permute.xlu0 %409
        %413 = vset.pattern.permute.xlu0 0
        %414 = vperm.xlu0 %413, %v293
        %v415 = vpop.permute.xlu0 %414
        %418 = vset.pattern.permute.xlu0 0
        %419 = vperm.xlu0 %418, %v294
        %v420 = vpop.permute.xlu0 %419
        %v422 = vadd.f32 %v372, %v405
        %v423 = vadd.f32 %v375, %v410
        %v424 = vadd.f32 %v380, %v415
        %v425 = vadd.f32 %v383, %v420
        %v426 = vmax.f32 %v422, 0.0
        %v427 = vmax.f32 %v423, 0.0
        %v428 = vmax.f32 %v424, 0.0
        %v429 = vmax.f32 %v425, 0.0
        %430 = vset.pattern.permute.xlu0 1
        %431 = vperm.xlu0 %430, %v291
        %v432 = vpop.permute.xlu0 %431
        %434 = vset.pattern.permute.xlu0 1
        %435 = vperm.xlu0 %434, %v292
        %v436 = vpop.permute.xlu0 %435
        %438 = vset.pattern.permute.xlu0 1
        %439 = vperm.xlu0 %438, %v293
        %v440 = vpop.permute.xlu0 %439
        %442 = vset.pattern.permute.xlu0 1
        %443 = vperm.xlu0 %442, %v294
        %v444 = vpop.permute.xlu0 %443
        %v446 = vmul.f32 %v426, %v432
        %v447 = vmul.f32 %v427, %v436
        %v448 = vmul.f32 %v428, %v440
        %v449 = vmul.f32 %v429, %v444
        %450 = vset.pattern.permute.xlu0 2
        %451 = vperm.xlu0 %450, %v291
        %v452 = vpop.permute.xlu0 %451
        %454 = vset.pattern.permute.xlu0 2
        %455 = vperm.xlu0 %454, %v292
        %v456 = vpop.permute.xlu0 %455
        %458 = vset.pattern.permute.xlu0 2
        %459 = vperm.xlu0 %458, %v293
        %v460 = vpop.permute.xlu0 %459
        %462 = vset.pattern.permute.xlu0 2
        %463 = vperm.xlu0 %462, %v294
        %v464 = vpop.permute.xlu0 %463
        %v466 = vadd.f32 %v446, %v452
        %v467 = vadd.f32 %v447, %v456
        %v468 = vadd.f32 %v448, %v460
        %v469 = vadd.f32 %v449, %v464
        %v470 = vlaneseq
        %v471 = vand.u32 %v470, 127
        %vm472 = vcmp.lt.s32.totalorder %v471, 0
        %v473 = vsub.s32 0, %v471
        %v474 = vsel %vm472, %v473, %v471
        %v475 = vshrl.u32 %v474, 7
        %v476 = vand.u32 %v474, 127
        %v477 = vsub.s32 0, %v476
        %v478 = vsel %vm472, %v477, %v476
        %vm479 = vcmp.ne.s32.totalorder %v478, 0
        %vm480 = vcmp.lt.s32.totalorder %v478, 0
        %vm481 = vmand %vm480, %vm479
        %v482 = vadd.s32 %v478, 128
        %v483 = vsel %vm481, %v482, %v478
        %vm484 = vcmp.ge.s32.totalorder %v483, 2
        %vm485 = vcmp.lt.s32.totalorder %v483, 126
        %486 = vrot.lane.b32.xlu0 %v466, 2
        %v487 = vpop.permute.xlu0 %486
        %v488 = vsel %vm484, %v487, 0.0
        %489 = vrot.lane.b32.xlu0 %v466, 126
        %v490 = vpop.permute.xlu0 %489
        %v491 = vsel %vm485, %v490, 0.0
        %v492 = vld [vmem:[%s2] sm:$0xf]
        %v493 = vpack.c.bf16 %v466, %v488
        %v494 = vpack.c.bf16 %v491, %v491
        %495 = vset.pattern.permute.xlu0 3
        %496 = vperm.xlu0 %495, %v291
        %v497 = vpop.permute.xlu0 %496
        %vm499 = vcmask 195584
        %v501 = vsel %vm499, %v492, 0
        %vm503 = vcmask 1043456
        %v505 = vsel %vm503, %v494, 0
        %507 = vmatprep.subr.bf16.mxu0 0
        %508 = vmatpush1.bf16.msra.mxu0 %v493
        %509 = vmatprep.subr.bf16.mxu0 0
        %510 = vmatpush1.bf16.msra.mxu0 %v505
        %511 = vmatprep.subr.bf16.mxu0 0
        %512 = vmatpush1.bf16.msra.mxu0 0
        %513 = vmatprep.subr.bf16.mxu0 0
        %514 = vmatpush1.bf16.msra.mxu0 0
        %515 = vmatprep.subr.bf16.mxu0 0
        %516 = vmatpush1.bf16.msra.mxu0 0
        %517 = vmatprep.subr.bf16.mxu0 0
        %518 = vmatpush1.bf16.msra.mxu0 0
        %519 = vmatprep.subr.bf16.mxu0 0
        %520 = vmatpush1.bf16.msra.mxu0 0
        %521 = vmatprep.subr.bf16.mxu0 0
        %522 = vmatpush1.bf16.msra.mxu0 0
        %523 = vmatprep.subr.bf16.mxu0 0
        %524 = vmatpush1.bf16.msra.mxu0 0
        %525 = vmatprep.subr.bf16.mxu0 0
        %526 = vmatpush1.bf16.msra.mxu0 0
        %527 = vmatprep.subr.bf16.mxu0 0
        %528 = vmatpush1.bf16.msra.mxu0 0
        %529 = vmatprep.subr.bf16.mxu0 0
        %530 = vmatpush1.bf16.msra.mxu0 0
        %531 = vmatprep.subr.bf16.mxu0 0
        %532 = vmatpush1.bf16.msra.mxu0 0
        %533 = vmatprep.subr.bf16.mxu0 0
        %534 = vmatpush1.bf16.msra.mxu0 0
        %535 = vmatprep.subr.bf16.mxu0 0
        %536 = vmatpush1.bf16.msra.mxu0 0
        %537 = vmatprep.subr.bf16.mxu0 0
        %538 = vmatpush1.bf16.msra.mxu0 0
        %539 = vmatprep.mubr.bf16.mxu0 0
        %540 = vmatmul.mubr.bf16.gmra.mrb[0].mxu0 %v501
        %v541 = vpop.f32.mrb[0].mxu0
        %v542 = vadd.f32 %v497, %v541
        %v543 = vpop.f32.mrb[0].mxu0
        %v544 = vpop.f32.mrb[0].mxu0
        %v545 = vpop.f32.mrb[0].mxu0
        %546 = vdwg.mxu0
        %v547 = vmax.f32 %v542, 0.0
        %548 = vset.pattern.permute.xlu0 4
        %549 = vperm.xlu0 %548, %v291
        %v550 = vpop.permute.xlu0 %549
        %v552 = vmul.f32 %v547, %v550
        %553 = vset.pattern.permute.xlu0 5
        %554 = vperm.xlu0 %553, %v291
        %v555 = vpop.permute.xlu0 %554
        %v557 = vadd.f32 %v552, %v555
        %v558 = vadd.f32 %v557, %v467
        %559 = vrot.lane.b32.xlu0 %v558, 2
        %v560 = vpop.permute.xlu0 %559
        %v561 = vsel %vm484, %v560, 0.0
        %562 = vrot.lane.b32.xlu0 %v558, 126
        %v563 = vpop.permute.xlu0 %562
        %v564 = vsel %vm485, %v563, 0.0
        %s565 = scalar_lea.vmem %s2, 4
        %v566 = vld [vmem:[%s565] sm:$0xf]
        %v567 = vpack.c.bf16 %v558, %v561
        %v568 = vpack.c.bf16 %v564, %v564
        %569 = vset.pattern.permute.xlu0 3
        %570 = vperm.xlu0 %569, %v292
        %v571 = vpop.permute.xlu0 %570
        %v574 = vsel %vm499, %v566, 0
        %v577 = vsel %vm503, %v568, 0
        %579 = vmatprep.subr.bf16.mxu0 0
        %580 = vmatpush1.bf16.msra.mxu0 %v567
        %581 = vmatprep.subr.bf16.mxu0 0
        %582 = vmatpush1.bf16.msra.mxu0 %v577
        %583 = vmatprep.subr.bf16.mxu0 0
        %584 = vmatpush1.bf16.msra.mxu0 0
        %585 = vmatprep.subr.bf16.mxu0 0
        %586 = vmatpush1.bf16.msra.mxu0 0
        %587 = vmatprep.subr.bf16.mxu0 0
        %588 = vmatpush1.bf16.msra.mxu0 0
        %589 = vmatprep.subr.bf16.mxu0 0
        %590 = vmatpush1.bf16.msra.mxu0 0
        %591 = vmatprep.subr.bf16.mxu0 0
        %592 = vmatpush1.bf16.msra.mxu0 0
        %593 = vmatprep.subr.bf16.mxu0 0
        %594 = vmatpush1.bf16.msra.mxu0 0
        %595 = vmatprep.subr.bf16.mxu0 0
        %596 = vmatpush1.bf16.msra.mxu0 0
        %597 = vmatprep.subr.bf16.mxu0 0
        %598 = vmatpush1.bf16.msra.mxu0 0
        %599 = vmatprep.subr.bf16.mxu0 0
        %600 = vmatpush1.bf16.msra.mxu0 0
        %601 = vmatprep.subr.bf16.mxu0 0
        %602 = vmatpush1.bf16.msra.mxu0 0
        %603 = vmatprep.subr.bf16.mxu0 0
        %604 = vmatpush1.bf16.msra.mxu0 0
        %605 = vmatprep.subr.bf16.mxu0 0
        %606 = vmatpush1.bf16.msra.mxu0 0
        %607 = vmatprep.subr.bf16.mxu0 0
        %608 = vmatpush1.bf16.msra.mxu0 0
        %609 = vmatprep.subr.bf16.mxu0 0
        %610 = vmatpush1.bf16.msra.mxu0 0
        %611 = vmatprep.mubr.bf16.mxu0 0
        %612 = vmatmul.mubr.bf16.gmra.mrb[0].mxu0 %v574
        %v613 = vpop.f32.mrb[0].mxu0
        %v614 = vadd.f32 %v571, %v613
        %v615 = vpop.f32.mrb[0].mxu0
        %v616 = vpop.f32.mrb[0].mxu0
        %v617 = vpop.f32.mrb[0].mxu0
        %618 = vdwg.mxu0
        %v619 = vmax.f32 %v614, 0.0
        %620 = vset.pattern.permute.xlu0 4
        %621 = vperm.xlu0 %620, %v292
        %v622 = vpop.permute.xlu0 %621
        %v624 = vmul.f32 %v619, %v622
        %625 = vset.pattern.permute.xlu0 5
        %626 = vperm.xlu0 %625, %v292
        %v627 = vpop.permute.xlu0 %626
        %v629 = vadd.f32 %v624, %v627
        %v630 = vadd.f32 %v629, %v468
        %631 = vrot.lane.b32.xlu0 %v630, 2
        %v632 = vpop.permute.xlu0 %631
        %v633 = vsel %vm484, %v632, 0.0
        %634 = vrot.lane.b32.xlu0 %v630, 126
        %v635 = vpop.permute.xlu0 %634
        %v636 = vsel %vm485, %v635, 0.0
        %s637 = scalar_lea.vmem %s2, 8
        %v638 = vld [vmem:[%s637] sm:$0xf]
        %v639 = vpack.c.bf16 %v630, %v633
        %v640 = vpack.c.bf16 %v636, %v636
        %641 = vset.pattern.permute.xlu0 3
        %642 = vperm.xlu0 %641, %v293
        %v643 = vpop.permute.xlu0 %642
        %v646 = vsel %vm499, %v638, 0
        %v649 = vsel %vm503, %v640, 0
        %651 = vmatprep.subr.bf16.mxu0 0
        %652 = vmatpush1.bf16.msra.mxu0 %v639
        %653 = vmatprep.subr.bf16.mxu0 0
        %654 = vmatpush1.bf16.msra.mxu0 %v649
        %655 = vmatprep.subr.bf16.mxu0 0
        %656 = vmatpush1.bf16.msra.mxu0 0
        %657 = vmatprep.subr.bf16.mxu0 0
        %658 = vmatpush1.bf16.msra.mxu0 0
        %659 = vmatprep.subr.bf16.mxu0 0
        %660 = vmatpush1.bf16.msra.mxu0 0
        %661 = vmatprep.subr.bf16.mxu0 0
        %662 = vmatpush1.bf16.msra.mxu0 0
        %663 = vmatprep.subr.bf16.mxu0 0
        %664 = vmatpush1.bf16.msra.mxu0 0
        %665 = vmatprep.subr.bf16.mxu0 0
        %666 = vmatpush1.bf16.msra.mxu0 0
        %667 = vmatprep.subr.bf16.mxu0 0
        %668 = vmatpush1.bf16.msra.mxu0 0
        %669 = vmatprep.subr.bf16.mxu0 0
        %670 = vmatpush1.bf16.msra.mxu0 0
        %671 = vmatprep.subr.bf16.mxu0 0
        %672 = vmatpush1.bf16.msra.mxu0 0
        %673 = vmatprep.subr.bf16.mxu0 0
        %674 = vmatpush1.bf16.msra.mxu0 0
        %675 = vmatprep.subr.bf16.mxu0 0
        %676 = vmatpush1.bf16.msra.mxu0 0
        %677 = vmatprep.subr.bf16.mxu0 0
        %678 = vmatpush1.bf16.msra.mxu0 0
        %679 = vmatprep.subr.bf16.mxu0 0
        %680 = vmatpush1.bf16.msra.mxu0 0
        %681 = vmatprep.subr.bf16.mxu0 0
        %682 = vmatpush1.bf16.msra.mxu0 0
        %683 = vmatprep.mubr.bf16.mxu0 0
        %684 = vmatmul.mubr.bf16.gmra.mrb[0].mxu0 %v646
        %v685 = vpop.f32.mrb[0].mxu0
        %v686 = vadd.f32 %v643, %v685
        %v687 = vpop.f32.mrb[0].mxu0
        %v688 = vpop.f32.mrb[0].mxu0
        %v689 = vpop.f32.mrb[0].mxu0
        %690 = vdwg.mxu0
        %v691 = vmax.f32 %v686, 0.0
        %692 = vset.pattern.permute.xlu0 4
        %693 = vperm.xlu0 %692, %v293
        %v694 = vpop.permute.xlu0 %693
        %v696 = vmul.f32 %v691, %v694
        %697 = vset.pattern.permute.xlu0 5
        %698 = vperm.xlu0 %697, %v293
        %v699 = vpop.permute.xlu0 %698
        %v701 = vadd.f32 %v696, %v699
        %v702 = vld [vmem:[%s3] sm:$0xf]
        %v703 = vld [vmem:[%s3 + $0x4] sm:$0xf]
        %v704 = vld [vmem:[%s3 + $0x8] sm:$0xf]
        %v705 = vld [vmem:[%s3 + $0xc] sm:$0xf]
        %v706 = vpack.c.bf16 %v629, %v557
        %v707 = vpack.c.bf16 %v469, %v701
        %708 = vset.pattern.permute.xlu0 6
        %709 = vperm.xlu0 %708, %v291
        %v710 = vpop.permute.xlu0 %709
        %712 = vset.pattern.permute.xlu0 6
        %713 = vperm.xlu0 %712, %v292
        %v714 = vpop.permute.xlu0 %713
        %716 = vset.pattern.permute.xlu0 6
        %717 = vperm.xlu0 %716, %v293
        %v718 = vpop.permute.xlu0 %717
        %720 = vset.pattern.permute.xlu0 6
        %721 = vperm.xlu0 %720, %v294
        %v722 = vpop.permute.xlu0 %721
        %v728 = vunpack.c.l.b16 %v702
        %v729 = vunpack.c.l.b16 %v703
        %v730 = vunpack.c.l.b16 %v704
        %v731 = vunpack.c.l.b16 %v705
        %v732 = vpack.c.b16 %v729, %v728
        %v733 = vpack.c.b16 %v731, %v730
        %vm734 = vcmask 261120
        %v736 = vsel %vm734, %v732, 0
        %v739 = vsel %vm734, %v733, 0
        %741 = vmatprep.subr.bf16.mxu0 0
        %742 = vmatpush1.bf16.msra.mxu0 %v706
        %743 = vmatprep.subr.bf16.mxu0 0
        %744 = vmatpush1.bf16.msra.mxu0 %v707
        %745 = vmatprep.subr.bf16.mxu0 0
        %746 = vmatpush1.bf16.msra.mxu0 0
        %747 = vmatprep.subr.bf16.mxu0 0
        %748 = vmatpush1.bf16.msra.mxu0 0
        %749 = vmatprep.subr.bf16.mxu0 0
        %750 = vmatpush1.bf16.msra.mxu0 0
        %751 = vmatprep.subr.bf16.mxu0 0
        %752 = vmatpush1.bf16.msra.mxu0 0
        %753 = vmatprep.subr.bf16.mxu0 0
        %754 = vmatpush1.bf16.msra.mxu0 0
        %755 = vmatprep.subr.bf16.mxu0 0
        %756 = vmatpush1.bf16.msra.mxu0 0
        %757 = vmatprep.subr.bf16.mxu0 0
        %758 = vmatpush1.bf16.msra.mxu0 0
        %759 = vmatprep.subr.bf16.mxu0 0
        %760 = vmatpush1.bf16.msra.mxu0 0
        %761 = vmatprep.subr.bf16.mxu0 0
        %762 = vmatpush1.bf16.msra.mxu0 0
        %763 = vmatprep.subr.bf16.mxu0 0
        %764 = vmatpush1.bf16.msra.mxu0 0
        %765 = vmatprep.subr.bf16.mxu0 0
        %766 = vmatpush1.bf16.msra.mxu0 0
        %767 = vmatprep.subr.bf16.mxu0 0
        %768 = vmatpush1.bf16.msra.mxu0 0
        %769 = vmatprep.subr.bf16.mxu0 0
        %770 = vmatpush1.bf16.msra.mxu0 0
        %771 = vmatprep.subr.bf16.mxu0 0
        %772 = vmatpush1.bf16.msra.mxu0 0
        %773 = vmatprep.mubr.bf16.mxu0 0
        %774 = vmatmul.mubr.bf16.gmra.mrb[0].mxu0 %v736
        %v775 = vpop.f32.mrb[0].mxu0
        %v776 = vadd.f32 %v710, %v775
        %v777 = vpop.f32.mrb[0].mxu0
        %v778 = vpop.f32.mrb[0].mxu0
        %v779 = vadd.f32 %v714, %v778
        %v780 = vpop.f32.mrb[0].mxu0
        %781 = vmatprep.mubr.bf16.mxu0 0
        %782 = vmatmul.mubr.bf16.gmra.mrb[0].mxu0 %v739
        %v783 = vpop.f32.mrb[0].mxu0
        %v784 = vadd.f32 %v718, %v783
        %v785 = vpop.f32.mrb[0].mxu0
        %v786 = vpop.f32.mrb[0].mxu0
        %v787 = vadd.f32 %v722, %v786
        %v788 = vpop.f32.mrb[0].mxu0
        %789 = vdwg.mxu0
        %v790 = vmax.f32 %v776, 0.0
        %v791 = vmax.f32 %v779, 0.0
        %v792 = vmax.f32 %v784, 0.0
        %v793 = vmax.f32 %v787, 0.0
        %794 = vset.pattern.permute.xlu0 7
        %795 = vperm.xlu0 %794, %v291
        %v796 = vpop.permute.xlu0 %795
        %798 = vset.pattern.permute.xlu0 7
        %799 = vperm.xlu0 %798, %v292
        %v800 = vpop.permute.xlu0 %799
        %802 = vset.pattern.permute.xlu0 7
        %803 = vperm.xlu0 %802, %v293
        %v804 = vpop.permute.xlu0 %803
        %806 = vset.pattern.permute.xlu0 7
        %807 = vperm.xlu0 %806, %v294
        %v808 = vpop.permute.xlu0 %807
        %v810 = vmul.f32 %v790, %v796
        %v811 = vmul.f32 %v791, %v800
        %v812 = vmul.f32 %v792, %v804
        %v813 = vmul.f32 %v793, %v808
        %814 = vset.pattern.permute.xlu0 8
        %815 = vperm.xlu0 %814, %v291
        %v816 = vpop.permute.xlu0 %815
        %818 = vset.pattern.permute.xlu0 8
        %819 = vperm.xlu0 %818, %v292
        %v820 = vpop.permute.xlu0 %819
        %822 = vset.pattern.permute.xlu0 8
        %823 = vperm.xlu0 %822, %v293
        %v824 = vpop.permute.xlu0 %823
        %826 = vset.pattern.permute.xlu0 8
        %827 = vperm.xlu0 %826, %v294
        %v828 = vpop.permute.xlu0 %827
        %v830 = vadd.f32 %v810, %v816
        %v831 = vadd.f32 %v811, %v820
        %v832 = vadd.f32 %v812, %v824
        %v833 = vadd.f32 %v813, %v828
        %v834 = vadd.f32 %v830, %v388
        %v835 = vadd.f32 %v831, %v391
        %v836 = vadd.f32 %v832, %v396
        %v837 = vadd.f32 %v833, %v399
        %838 = vadd.xlane.f32.xlu0 %v834
        %v839 = vpop.xlane.xlu0 %838
        %840 = vadd.xlane.f32.xlu0 %v835
        %v841 = vpop.xlane.xlu0 %840
        %842 = vadd.xlane.f32.xlu0 %v836
        %v843 = vpop.xlane.xlu0 %842
        %844 = vadd.xlane.f32.xlu0 %v837
        %v845 = vpop.xlane.xlu0 %844
        %v846 = vmul.f32 %v839, 0.0078125
        %v847 = vmul.f32 %v841, 0.0078125
        %v848 = vmul.f32 %v843, 0.0078125
        %v849 = vmul.f32 %v845, 0.0078125
        %v850 = vld [vmem:[%s4] sm:$0xf]
        %v851 = vld [vmem:[%s4 + $0x4] sm:$0xf]
        %v852 = vld [vmem:[%s4 + $0x8] sm:$0xf]
        %v853 = vld [vmem:[%s4 + $0xc] sm:$0xf]
        %v854 = vpack.c.bf16 %v847, %v846
        %v855 = vpack.c.bf16 %v849, %v848
        %v860 = vunpack.c.l.b16 %v850
        %v861 = vunpack.c.l.b16 %v851
        %v862 = vunpack.c.l.b16 %v852
        %v863 = vunpack.c.l.b16 %v853
        %v864 = vpack.c.b16 %v861, %v860
        %v865 = vpack.c.b16 %v863, %v862
        %866 = vrot.lane.b32.xlu0 %v291, 119
        %v867 = vpop.permute.xlu0 %866
        %868 = vrot.lane.b32.xlu0 %v292, 119
        %v869 = vpop.permute.xlu0 %868
        %870 = vrot.lane.b32.xlu0 %v293, 119
        %v871 = vpop.permute.xlu0 %870
        %872 = vrot.lane.b32.xlu0 %v294, 119
        %v873 = vpop.permute.xlu0 %872
        %v879 = vsel %vm734, %v864, 0
        %v882 = vsel %vm734, %v865, 0
        %884 = vmatprep.subr.bf16.mxu0 0
        %885 = vmatpush1.bf16.msra.mxu0 %v854
        %886 = vmatprep.subr.bf16.mxu0 0
        %887 = vmatpush1.bf16.msra.mxu0 %v855
        %888 = vmatprep.subr.bf16.mxu0 0
        %889 = vmatpush1.bf16.msra.mxu0 0
        %890 = vmatprep.subr.bf16.mxu0 0
        %891 = vmatpush1.bf16.msra.mxu0 0
        %892 = vmatprep.subr.bf16.mxu0 0
        %893 = vmatpush1.bf16.msra.mxu0 0
        %894 = vmatprep.subr.bf16.mxu0 0
        %895 = vmatpush1.bf16.msra.mxu0 0
        %896 = vmatprep.subr.bf16.mxu0 0
        %897 = vmatpush1.bf16.msra.mxu0 0
        %898 = vmatprep.subr.bf16.mxu0 0
        %899 = vmatpush1.bf16.msra.mxu0 0
        %900 = vmatprep.subr.bf16.mxu0 0
        %901 = vmatpush1.bf16.msra.mxu0 0
        %902 = vmatprep.subr.bf16.mxu0 0
        %903 = vmatpush1.bf16.msra.mxu0 0
        %904 = vmatprep.subr.bf16.mxu0 0
        %905 = vmatpush1.bf16.msra.mxu0 0
        %906 = vmatprep.subr.bf16.mxu0 0
        %907 = vmatpush1.bf16.msra.mxu0 0
        %908 = vmatprep.subr.bf16.mxu0 0
        %909 = vmatpush1.bf16.msra.mxu0 0
        %910 = vmatprep.subr.bf16.mxu0 0
        %911 = vmatpush1.bf16.msra.mxu0 0
        %912 = vmatprep.subr.bf16.mxu0 0
        %913 = vmatpush1.bf16.msra.mxu0 0
        %914 = vmatprep.subr.bf16.mxu0 0
        %915 = vmatpush1.bf16.msra.mxu0 0
        %916 = vmatprep.mubr.bf16.mxu0 0
        %917 = vmatmul.mubr.bf16.gmra.mrb[0].mxu0 %v879
        %v918 = vpop.f32.mrb[0].mxu0
        %v919 = vadd.f32 %v867, %v918
        %v920 = vpop.f32.mrb[0].mxu0
        %v921 = vpop.f32.mrb[0].mxu0
        %v922 = vadd.f32 %v869, %v921
        %v923 = vpop.f32.mrb[0].mxu0
        %924 = vmatprep.mubr.bf16.mxu0 0
        %925 = vmatmul.mubr.bf16.gmra.mrb[0].mxu0 %v882
        %v926 = vpop.f32.mrb[0].mxu0
        %v927 = vadd.f32 %v871, %v926
        %v928 = vpop.f32.mrb[0].mxu0
        %v929 = vpop.f32.mrb[0].mxu0
        %v930 = vadd.f32 %v873, %v929
        %v931 = vpop.f32.mrb[0].mxu0
        %932 = vdwg.mxu0
        %v933 = vxor.u32 %v919, 2147483648
        %v934 = vxor.u32 %v922, 2147483648
        %v935 = vxor.u32 %v927, 2147483648
        %v936 = vxor.u32 %v930, 2147483648
        %v937 = vmul.f32 %v933, 1.442695
        %v938 = vpow.pop %v937
        %v939 = vmul.f32 %v934, 1.442695
        %v940 = vpow.pop %v939
        %v941 = vmul.f32 %v935, 1.442695
        %v942 = vpow.pop %v941
        %v943 = vmul.f32 %v936, 1.442695
        %v944 = vpow.pop %v943
        %v945 = vadd.f32 %v938, 1.0
        %v946 = vadd.f32 %v940, 1.0
        %v947 = vadd.f32 %v942, 1.0
        %v948 = vadd.f32 %v944, 1.0
        %v949 = vrcp.pop %v945
        %v950 = vmul.f32 1.0, %v949
        %v951 = vrcp.pop %v946
        %v952 = vmul.f32 1.0, %v951
        %v953 = vrcp.pop %v947
        %v954 = vmul.f32 1.0, %v953
        %v955 = vrcp.pop %v948
        %v956 = vmul.f32 1.0, %v955
        %957 = vset.pattern.permute.xlu0 10
        %958 = vperm.xlu0 %957, %v291
        %v959 = vpop.permute.xlu0 %958
        %961 = vset.pattern.permute.xlu0 10
        %962 = vperm.xlu0 %961, %v292
        %v963 = vpop.permute.xlu0 %962
        %965 = vset.pattern.permute.xlu0 10
        %966 = vperm.xlu0 %965, %v293
        %v967 = vpop.permute.xlu0 %966
        %969 = vset.pattern.permute.xlu0 10
        %970 = vperm.xlu0 %969, %v294
        %v971 = vpop.permute.xlu0 %970
        %v973 = vadd.f32 %v834, %v959
        %v974 = vadd.f32 %v835, %v963
        %v975 = vadd.f32 %v836, %v967
        %v976 = vadd.f32 %v837, %v971
        %978 = vset.pattern.permute.xlu0 0
        %979 = vperm.xlu0 %978, %v950
        %v980 = vpop.permute.xlu0 %979
        %983 = vset.pattern.permute.xlu0 0
        %984 = vperm.xlu0 %983, %v952
        %v985 = vpop.permute.xlu0 %984
        %988 = vset.pattern.permute.xlu0 0
        %989 = vperm.xlu0 %988, %v954
        %v990 = vpop.permute.xlu0 %989
        %993 = vset.pattern.permute.xlu0 0
        %994 = vperm.xlu0 %993, %v956
        %v995 = vpop.permute.xlu0 %994
        %v997 = vmul.f32 %v973, %v980
        %v998 = vmul.f32 %v974, %v985
        %v999 = vmul.f32 %v975, %v990
        %v1000 = vmul.f32 %v976, %v995
        %1001 = vst [vmem:[%s287] sm:$0xff] %v997
        %1002 = vst [vmem:[%s287 + $0x8] sm:$0xff] %v998
        %1003 = vst [vmem:[%s287 + $0x10] sm:$0xff] %v999
        %1004 = vst [vmem:[%s287 + $0x18] sm:$0xff] %v1000
        %s1005 = sand.u32 %s159, 1
        %s1006 = scalar_lea.sflag [#allocation4], %s1005
        %s1007 = sand.u32 %s159, 1
        %s1008 = smul.addr %s1007, 32
        %s1009 = scalar_lea.vmem [#allocation3], %s1008
        // Predicated region
        $region83: #{tpu_custom_call.1} parent=77 // pred_check
          %p1010 = pneg %p169
        $region84: #{tpu_custom_call.1} parent=77 // pred_check_branch
          %1012 = sbr.rel (%p1010) target = $region86
        $region85: #{tpu_custom_call.1} parent=77 // pred_region
          %s1014 = ssub.s32 512, 512
          %1015 = vsyncadd %s1006, %s1014
          %s1016 = smul.addr %s20, 128
          %s1017 = scalar_lea.hbm %s6, %s1016
          %s1018 = sshll.u32 %s1009, 4
          %s1019 = int_to_ptr.vmem [resolvable:$true] %s1018
          %1024 = dma.vmem_to_hbm [thread:$0]  %s1019, 512, %s1017, %s1006, 128, 256, 8
        $region86: #{tpu_custom_call.1} parent=77 // pred_fallthru
          _
      $region78: #{tpu_custom_call.1} parent=5 // pred_fallthru
        _
      %p1025 = scmp.le.s32.totalorder 2, %s15
      // Predicated region
      $region87: #{tpu_custom_call.1} parent=5 // pred_check
        %p1026 = pneg %p1025
      $region88: #{tpu_custom_call.1} parent=5 // pred_check_branch
        %1028 = sbr.rel (%p1026) target = $region90
      $region89: #{tpu_custom_call.1} parent=5 // pred_region
        %s1029 = ssub.s32 %s15, 2
        // Predicated region
        $region91: #{tpu_custom_call.1} parent=89 // pred_check
          %p1030 = pneg %p175
        $region92: #{tpu_custom_call.1} parent=89 // pred_check_branch
          %1032 = sbr.rel (%p1030) target = $region94
        $region93: #{tpu_custom_call.1} parent=89 // pred_region
          %s1033 = sand.u32 %s160, 1
          %s1034 = scalar_lea.sflag [#allocation4], %s1033
          %s1035 = sand.u32 %s160, 1
          %s1036 = smul.addr %s1035, 32
          %s1037 = scalar_lea.vmem [#allocation3], %s1036
          %1038 = dma.done %s1034, 512
        $region94: #{tpu_custom_call.1} parent=89 // pred_fallthru
          _
      $region90: #{tpu_custom_call.1} parent=5 // pred_fallthru
        _
    $region6: #{tpu_custom_call.1} parent=1 // loop_footer
      %s19 = sadd.s32 1, %s15
    $region7: #{tpu_custom_call.1} parent=1 // loop_footer_branch
      %14 = sbr.rel target = $region3
    $region8: #{tpu_custom_call.1} parent=1 // loop_exit
      _
    %1039 = vsyncpa [#allocation4], 1
    %s1040 = scalar_lea.sflag [#allocation4], 1
    %1041 = vsyncpa %s1040, 1

</llo_original>
